<compile_context>
chip_gen: v7x
topology: tpu7x:2x2x1
jax: 0.10.0
libtpu: 0.0.40
codegen_flags: <defaults>
</compile_context>

<pallas_src>
import functools

import jax
import jax.numpy as jnp
from jax.experimental import pallas as pl
from jax.experimental.pallas import tpu as pltpu

_LANES = 128


def _backproject_kernel(invk_ref, pix_ref, depth_ref, out_ref):
    # invk_ref : (B, 16)         SMEM -- row-major flattened inv_K per batch element
    # pix_ref  : (2, S, 128)     VMEM -- x / y pixel coordinates for this row tile
    # depth_ref: (1, S, 128)     VMEM -- depth tile for batch b
    # out_ref  : (1, 4, S, 128)  VMEM -- cam_points tile for batch b
    b = pl.program_id(1)

    x = pix_ref[0]          # (S, 128)
    y = pix_ref[1]          # (S, 128)
    d = depth_ref[0]        # (S, 128)

    k00 = invk_ref[b, 0]
    k01 = invk_ref[b, 1]
    k02 = invk_ref[b, 2]
    k10 = invk_ref[b, 4]
    k11 = invk_ref[b, 5]
    k12 = invk_ref[b, 6]
    k20 = invk_ref[b, 8]
    k21 = invk_ref[b, 9]
    k22 = invk_ref[b, 10]

    dt = out_ref.dtype
    # cam_i = inv_K[i, :3] @ [x, y, 1];  cam_points[:3] = depth * cam;  row 3 = 1.
    out_ref[0, 0] = (d * (k00 * x + k01 * y + k02)).astype(dt)
    out_ref[0, 1] = (d * (k10 * x + k11 * y + k12)).astype(dt)
    out_ref[0, 2] = (d * (k20 * x + k21 * y + k22)).astype(dt)
    out_ref[0, 3] = jnp.ones(d.shape, dtype=dt)


def _round_up(x, m):
    return (x + m - 1) // m * m


def _choose_row_tile(num_rows, max_rows):
    """Sublane tile: full dim if small, else a multiple of 8 (preferring an exact
    divisor of num_rows so every grid step is a full, unmasked block)."""
    if num_rows <= max_rows:
        return num_rows
    limit = max(8, max_rows - max_rows % 8)
    for s in range(limit, 7, -8):
        if num_rows % s == 0:
            return s
    return limit  # ragged last block; Pallas masks the partial write.


def make_pix_xy(height, width):
    """x/y pixel-coordinate table (2, H*W), matching the PyTorch module's
    np.meshgrid(..., indexing='xy') flattening (x varies fastest along W)."""
    xs, ys = jnp.meshgrid(jnp.arange(width, dtype=jnp.float32),
                          jnp.arange(height, dtype=jnp.float32),
                          indexing="xy")
    return jnp.stack([xs.reshape(-1), ys.reshape(-1)], axis=0)   # (2, H*W)


@functools.partial(jax.jit, static_argnames=("height", "width", "max_rows"))
def backproject_depth(depth, inv_K, *, height, width, max_rows=512):
    """depth: (B, 1, H, W); inv_K: (B, 4, 4) -> cam_points (B, 4, H*W)."""
    B = depth.shape[0]
    HW = height * width

    # Lane-dense layout: HW -> (R, 128).  Pad only up to a 128-lane multiple (a no-op
    # for typical monodepth shapes); no big tile-sized pad / output slice.
    hw_pad = _round_up(HW, _LANES)
    pad = hw_pad - HW
    R = hw_pad // _LANES

    depth_flat = depth.reshape(B, HW).astype(jnp.float32)
    pix_xy = make_pix_xy(height, width)
    if pad:
        depth_flat = jnp.pad(depth_flat, ((0, 0), (0, pad)))
        pix_xy = jnp.pad(pix_xy, ((0, 0), (0, pad)))
    depth_r = depth_flat.reshape(B, R, _LANES)
    pix_r = pix_xy.reshape(2, R, _LANES)

    invk_flat = inv_K.reshape(B, 16).astype(jnp.float32)

    # Row tile: up to 512 rows (65536 lanes) per step.  Double-buffered
    # pix + depth + out ~= 7 KiB/row -> <= ~3.5 MiB VMEM, safe on v5e/v6e/v7x.
    S = _choose_row_tile(R, max_rows)
    grid = (pl.cdiv(R, S), B)   # batch fastest -> shared pix tile not re-fetched per b.

    out4 = pl.pallas_call(
        _backproject_kernel,
        out_shape=jax.ShapeDtypeStruct((B, 4, R, _LANES), jnp.float32),
        grid_spec=pltpu.PrefetchScalarGridSpec(
            num_scalar_prefetch=0,
            grid=grid,
            in_specs=[
                pl.BlockSpec(memory_space=pltpu.MemorySpace.SMEM),       # inv_K scalars
                pl.BlockSpec((2, S, _LANES), lambda t, b: (0, t, 0)),    # pix x/y (shared)
                pl.BlockSpec((1, S, _LANES), lambda t, b: (b, t, 0)),    # depth
            ],
            out_specs=pl.BlockSpec((1, 4, S, _LANES), lambda t, b: (b, 0, t, 0)),
        ),
        compiler_params=pltpu.CompilerParams(
            dimension_semantics=("parallel", "parallel")),
    )(invk_flat, pix_r, depth_r)

    out = out4.reshape(B, 4, hw_pad)          # contiguous -> free metadata reshape
    return out[:, :, :HW] if pad else out


def backproject_depth_ref(depth, inv_K, height, width):
    """Pure-JAX reference matching the PyTorch forward."""
    B = depth.shape[0]
    HW = height * width
    pix_xy = make_pix_xy(height, width)
    ones = jnp.ones((1, HW), dtype=jnp.float32)
    pix = jnp.broadcast_to(jnp.concatenate([pix_xy, ones], axis=0)[None],
                           (B, 3, HW))
    cam = jnp.matmul(inv_K[:, :3, :3], pix,
                     precision=jax.lax.Precision.HIGHEST)        # (B, 3, HW)
    cam = depth.reshape(B, 1, HW) * cam
    return jnp.concatenate([cam, jnp.ones((B, 1, HW), jnp.float32)], axis=1)


if __name__ == "__main__":
    B, H, W = 2, 16, 16

    key = jax.random.PRNGKey(0)
    k_depth, k_invk = jax.random.split(key)
    # positive depth map, NCHW like the PyTorch module expects
    depth = jax.random.uniform(k_depth, (B, 1, H, W), jnp.float32,
                               minval=0.1, maxval=10.0)
    inv_K = jax.random.normal(k_invk, (B, 4, 4), jnp.float32)

    out = backproject_depth(depth, inv_K, height=H, width=W)
    out = jax.block_until_ready(out)

    ref = backproject_depth_ref(depth, inv_K, H, W)
    assert out.shape == (B, 4, H * W)
    assert jnp.allclose(out, ref, atol=1e-4, rtol=1e-4)

    print("KERNEL_OK")
</pallas_src>

<mosaic_0001>
module attributes {stable_mosaic.version = 11 : i64} {
  func.func @_backproject_kernel(%arg0: i32, %arg1: i32, %arg2: memref<2x16xf32, #tpu.memory_space<smem>>, %arg3: memref<2x2x128xf32, #tpu.memory_space<vmem>>, %arg4: memref<1x2x128xf32, #tpu.memory_space<vmem>>, %arg5: memref<1x4x2x128xf32, #tpu.memory_space<vmem>>) attributes {dimension_semantics = [#tpu.dimension_semantics<parallel>, #tpu.dimension_semantics<parallel>], iteration_bounds = array<i64: 1, 2>, scalar_prefetch = 0 : i64, scratch_operands = 0 : i64, tpu.core_type = #tpu.core_type<tc>, window_params = [{transform_indices = @transform_0, window_bounds = array<i64: 2, 16>}, {transform_indices = @transform_1, window_bounds = array<i64: 2, 2, 128>}, {transform_indices = @transform_2, window_bounds = array<i64: 1, 2, 128>}, {transform_indices = @transform_3, window_bounds = array<i64: 1, 4, 2, 128>}]} {
    %c0 = arith.constant 0 : index
    %c0_0 = arith.constant 0 : index
    %c0_1 = arith.constant 0 : index
    %0 = vector.load %arg3[%c0, %c0_0, %c0_1] : memref<2x2x128xf32, #tpu.memory_space<vmem>>, vector<1x2x128xf32>
    %1 = vector.shape_cast %0 : vector<1x2x128xf32> to vector<2x128xf32>
    %c1 = arith.constant 1 : index
    %c0_2 = arith.constant 0 : index
    %c0_3 = arith.constant 0 : index
    %2 = vector.load %arg3[%c1, %c0_2, %c0_3] : memref<2x2x128xf32, #tpu.memory_space<vmem>>, vector<1x2x128xf32>
    %3 = vector.shape_cast %2 : vector<1x2x128xf32> to vector<2x128xf32>
    %c0_4 = arith.constant 0 : index
    %c0_5 = arith.constant 0 : index
    %c0_6 = arith.constant 0 : index
    %4 = vector.load %arg4[%c0_4, %c0_5, %c0_6] : memref<1x2x128xf32, #tpu.memory_space<vmem>>, vector<1x2x128xf32>
    %5 = vector.shape_cast %4 : vector<1x2x128xf32> to vector<2x128xf32>
    %6 = arith.index_cast %arg1 : i32 to index
    %c0_7 = arith.constant 0 : index
    %7 = memref.load %arg2[%6, %c0_7] : memref<2x16xf32, #tpu.memory_space<smem>>
    %8 = arith.index_cast %arg1 : i32 to index
    %c1_8 = arith.constant 1 : index
    %9 = memref.load %arg2[%8, %c1_8] : memref<2x16xf32, #tpu.memory_space<smem>>
    %10 = arith.index_cast %arg1 : i32 to index
    %c2 = arith.constant 2 : index
    %11 = memref.load %arg2[%10, %c2] : memref<2x16xf32, #tpu.memory_space<smem>>
    %12 = arith.index_cast %arg1 : i32 to index
    %c4 = arith.constant 4 : index
    %13 = memref.load %arg2[%12, %c4] : memref<2x16xf32, #tpu.memory_space<smem>>
    %14 = arith.index_cast %arg1 : i32 to index
    %c5 = arith.constant 5 : index
    %15 = memref.load %arg2[%14, %c5] : memref<2x16xf32, #tpu.memory_space<smem>>
    %16 = arith.index_cast %arg1 : i32 to index
    %c6 = arith.constant 6 : index
    %17 = memref.load %arg2[%16, %c6] : memref<2x16xf32, #tpu.memory_space<smem>>
    %18 = arith.index_cast %arg1 : i32 to index
    %c8 = arith.constant 8 : index
    %19 = memref.load %arg2[%18, %c8] : memref<2x16xf32, #tpu.memory_space<smem>>
    %20 = arith.index_cast %arg1 : i32 to index
    %c9 = arith.constant 9 : index
    %21 = memref.load %arg2[%20, %c9] : memref<2x16xf32, #tpu.memory_space<smem>>
    %22 = arith.index_cast %arg1 : i32 to index
    %c10 = arith.constant 10 : index
    %23 = memref.load %arg2[%22, %c10] : memref<2x16xf32, #tpu.memory_space<smem>>
    %24 = vector.broadcast %7 : f32 to vector<2x128xf32>
    %25 = arith.mulf %24, %1 : vector<2x128xf32>
    %26 = vector.broadcast %9 : f32 to vector<2x128xf32>
    %27 = arith.mulf %26, %3 : vector<2x128xf32>
    %28 = arith.addf %25, %27 : vector<2x128xf32>
    %29 = vector.broadcast %11 : f32 to vector<2x128xf32>
    %30 = arith.addf %28, %29 : vector<2x128xf32>
    %31 = arith.mulf %5, %30 : vector<2x128xf32>
    %c0_9 = arith.constant 0 : index
    %c0_10 = arith.constant 0 : index
    %c0_11 = arith.constant 0 : index
    %c0_12 = arith.constant 0 : index
    %32 = vector.load %arg5[%c0_9, %c0_10, %c0_11, %c0_12] : memref<1x4x2x128xf32, #tpu.memory_space<vmem>>, vector<1x1x2x128xf32>
    %33 = vector.shape_cast %32 : vector<1x1x2x128xf32> to vector<2x128xf32>
    %34 = vector.shape_cast %31 : vector<2x128xf32> to vector<1x1x2x128xf32>
    tpu.vector_store %arg5[%c0_9, %c0_10, %c0_11, %c0_12], %34 {strides = array<i32>} : memref<1x4x2x128xf32, #tpu.memory_space<vmem>>, vector<1x1x2x128xf32>,
    %35 = vector.broadcast %13 : f32 to vector<2x128xf32>
    %36 = arith.mulf %35, %1 : vector<2x128xf32>
    %37 = vector.broadcast %15 : f32 to vector<2x128xf32>
    %38 = arith.mulf %37, %3 : vector<2x128xf32>
    %39 = arith.addf %36, %38 : vector<2x128xf32>
    %40 = vector.broadcast %17 : f32 to vector<2x128xf32>
    %41 = arith.addf %39, %40 : vector<2x128xf32>
    %42 = arith.mulf %5, %41 : vector<2x128xf32>
    %c0_13 = arith.constant 0 : index
    %c1_14 = arith.constant 1 : index
    %c0_15 = arith.constant 0 : index
    %c0_16 = arith.constant 0 : index
    %43 = vector.load %arg5[%c0_13, %c1_14, %c0_15, %c0_16] : memref<1x4x2x128xf32, #tpu.memory_space<vmem>>, vector<1x1x2x128xf32>
    %44 = vector.shape_cast %43 : vector<1x1x2x128xf32> to vector<2x128xf32>
    %45 = vector.shape_cast %42 : vector<2x128xf32> to vector<1x1x2x128xf32>
    tpu.vector_store %arg5[%c0_13, %c1_14, %c0_15, %c0_16], %45 {strides = array<i32>} : memref<1x4x2x128xf32, #tpu.memory_space<vmem>>, vector<1x1x2x128xf32>,
    %46 = vector.broadcast %19 : f32 to vector<2x128xf32>
    %47 = arith.mulf %46, %1 : vector<2x128xf32>
    %48 = vector.broadcast %21 : f32 to vector<2x128xf32>
    %49 = arith.mulf %48, %3 : vector<2x128xf32>
    %50 = arith.addf %47, %49 : vector<2x128xf32>
    %51 = vector.broadcast %23 : f32 to vector<2x128xf32>
    %52 = arith.addf %50, %51 : vector<2x128xf32>
    %53 = arith.mulf %5, %52 : vector<2x128xf32>
    %c0_17 = arith.constant 0 : index
    %c2_18 = arith.constant 2 : index
    %c0_19 = arith.constant 0 : index
    %c0_20 = arith.constant 0 : index
    %54 = vector.load %arg5[%c0_17, %c2_18, %c0_19, %c0_20] : memref<1x4x2x128xf32, #tpu.memory_space<vmem>>, vector<1x1x2x128xf32>
    %55 = vector.shape_cast %54 : vector<1x1x2x128xf32> to vector<2x128xf32>
    %56 = vector.shape_cast %53 : vector<2x128xf32> to vector<1x1x2x128xf32>
    tpu.vector_store %arg5[%c0_17, %c2_18, %c0_19, %c0_20], %56 {strides = array<i32>} : memref<1x4x2x128xf32, #tpu.memory_space<vmem>>, vector<1x1x2x128xf32>,
    %cst = arith.constant 1.000000e+00 : f32
    %57 = vector.broadcast %cst : f32 to vector<2x128xf32>
    %c0_21 = arith.constant 0 : index
    %c3 = arith.constant 3 : index
    %c0_22 = arith.constant 0 : index
    %c0_23 = arith.constant 0 : index
    %58 = vector.load %arg5[%c0_21, %c3, %c0_22, %c0_23] : memref<1x4x2x128xf32, #tpu.memory_space<vmem>>, vector<1x1x2x128xf32>
    %59 = vector.shape_cast %58 : vector<1x1x2x128xf32> to vector<2x128xf32>
    %60 = vector.shape_cast %57 : vector<2x128xf32> to vector<1x1x2x128xf32>
    tpu.vector_store %arg5[%c0_21, %c3, %c0_22, %c0_23], %60 {strides = array<i32>} : memref<1x4x2x128xf32, #tpu.memory_space<vmem>>, vector<1x1x2x128xf32>,
    return
  }
  func.func @transform_0(%arg0: i32, %arg1: i32) -> (i32, i32) {
    %c0_i32 = arith.constant 0 : i32
    %c0_i32_0 = arith.constant 0 : i32
    %c0_i32_1 = arith.constant 0 : i32
    return %c0_i32, %c0_i32_0 : i32, i32
  }
  func.func @transform_1(%arg0: i32, %arg1: i32) -> (i32, i32, i32) {
    %c0_i32 = arith.constant 0 : i32
    %c0_i32_0 = arith.constant 0 : i32
    %c0_i32_1 = arith.constant 0 : i32
    return %c0_i32, %arg0, %c0_i32_0 : i32, i32, i32
  }
  func.func @transform_2(%arg0: i32, %arg1: i32) -> (i32, i32, i32) {
    %c0_i32 = arith.constant 0 : i32
    %c0_i32_0 = arith.constant 0 : i32
    return %arg1, %arg0, %c0_i32 : i32, i32, i32
  }
  func.func @transform_3(%arg0: i32, %arg1: i32) -> (i32, i32, i32, i32) {
    %c0_i32 = arith.constant 0 : i32
    %c0_i32_0 = arith.constant 0 : i32
    %c0_i32_1 = arith.constant 0 : i32
    return %arg1, %c0_i32, %arg0, %c0_i32_0 : i32, i32, i32, i32
  }
}

</mosaic_0001>

<llo_original>
// kernel: backproject_depth.1
$region0: #{backproject_depth.1}
  #allocation0 [shape = 'u32[]', space=smem, size = 0x4, offset = 0x4, fixed_abs, tag = 'smem constant byte address 0x4 - core index']
  #allocation1 [shape = 'u32[144,128]{1,0:T(1,128)}', space=vmem, size = 0x12000, scoped, tag = 'internal scratch']
  %s0 = inlined_call_operand.vmem [shape: f32[2,16], index: 0, kind: input, shape index: {}]
  %s1 = inlined_call_operand.vmem [shape: f32[2,2,128], index: 1, kind: input, shape index: {}]
  %s2 = inlined_call_operand.vmem [shape: f32[2,2,128], index: 2, kind: input, shape index: {}]
  %s3 = inlined_call_operand.vmem [shape: f32[2,4,2,128], index: 3, kind: output, shape index: {}]
  %s4 = sld [smem:[#allocation0]]
  $region49: #{backproject_depth.1} parent=0
    _
  %s6 = ssub.s32 1, %s4
  %s7 = scalar_select 0, %s6, %s4
  $region1: #{backproject_depth.1} parent=0
    #allocation2 [shape = 'u8[1024]{0}', space=smem, size = 0x400, scoped, tag = 'input window, operand 0, single buffered']
    #allocation3 [shape = 's32[2]{0}', space=sflag, size = 0x8, scoped, tag = 'scoped memory for backproject_depth.1']
    %8 = vsyncpa [#allocation3], 0
    loop: start=0, step=1, limit=4
    $region2: #{backproject_depth.1} parent=1 // loop_pre_header
      _
    $region3: #{backproject_depth.1} parent=1 // loop_header
      %s10 = sphi 0, %s14
      %p11 = scmp.ge.s32.totalorder %s10, 4
      %s17 = sphi 0, %s29
      %s18 = sphi 0, %s25
      %s19 = sphi 0, %s17
      %s20 = sphi 0, %s18
      %s21 = sphi 0, %s19
      %s22 = sphi 0, %s20
      %s30 = sphi 0, %s30
      %s32 = sphi 0, %s30
      %s33 = sphi 0, %s32
      %s47 = sphi 0, %s33
      %s53 = sphi 0, %s55
      %s56 = sphi 0, %s53
      %s57 = sphi 0, %s56
      %s73 = sphi 0, %s57
      %s81 = sphi 0, %s83
      %s84 = sphi 0, %s81
      %s85 = sphi 0, %s84
      %s101 = sphi 0, %s85
      %s109 = sphi 0, %s111
      %s112 = sphi 0, %s109
      %s113 = sphi 0, %s112
      %s129 = sphi 0, %s113
    $region4: #{backproject_depth.1} parent=1 // loop_header_branch
      %13 = sbr.rel (%p11) target = $region8
    $region5: #{backproject_depth.1} parent=1 // loop_body
      %s15 = ssub.s32 %s10, 1
      %s16 = ssub.s32 %s10, 2
      %s23 = sadd.s32 1, %s18
      %p24 = scmp.ge.s32.totalorder %s23, 2
      %s25 = scalar_select %p24, 0, %s23
      %s26 = sadd.s32 1, %s17
      %s27 = scalar_select %p24, %s26, %s17
      %p28 = scmp.ge.s32.totalorder %s27, 1
      %s29 = scalar_select %p28, 0, %s27
      %s31 = sadd.s32 %s30, 1
      %p34 = scmp.eq.s32.totalorder %s10, 1
      %p35 = scmp.ne.s32.totalorder %s30, %s32
      %p36 = scmp.eq.s32.totalorder %s10, 0
      %p37 = por %p35, %p36
      %p38 = scmp.ne.s32.totalorder %s30, %s32
      %p39 = scmp.eq.s32.totalorder %s15, 1
      %p40 = por %p38, %p39
      %p41 = scmp.ne.s32.totalorder %s32, %s33
      %p42 = scmp.eq.s32.totalorder %s15, 0
      %p43 = por %p41, %p42
      %p44 = scmp.ne.s32.totalorder %s32, %s33
      %p45 = scmp.eq.s32.totalorder %s16, 1
      %p46 = por %p44, %p45
      %p48 = scmp.ne.s32.totalorder %s33, %s47
      %p49 = scmp.eq.s32.totalorder %s16, 0
      %p50 = por %p48, %p49
      %s51 = ssub.s32 %s17, %s29
      %p52 = scmp.eq.s32.totalorder %s51, 0
      %s54 = sadd.s32 %s53, 1
      %s55 = scalar_select %p52, %s53, %s54
      %p58 = pneg %p52
      %p59 = scmp.eq.s32.totalorder %s10, 1
      %p60 = por %p58, %p59
      %p61 = scmp.ne.s32.totalorder %s53, %s56
      %p62 = scmp.eq.s32.totalorder %s10, 0
      %p63 = por %p61, %p62
      %p64 = scmp.ne.s32.totalorder %s53, %s56
      %p65 = scmp.eq.s32.totalorder %s15, 1
      %p66 = por %p64, %p65
      %p67 = scmp.ne.s32.totalorder %s56, %s57
      %p68 = scmp.eq.s32.totalorder %s15, 0
      %p69 = por %p67, %p68
      %p70 = scmp.ne.s32.totalorder %s56, %s57
      %p71 = scmp.eq.s32.totalorder %s16, 1
      %p72 = por %p70, %p71
      %p74 = scmp.ne.s32.totalorder %s57, %s73
      %p75 = scmp.eq.s32.totalorder %s16, 0
      %p76 = por %p74, %p75
      %s77 = ssub.s32 %s18, %s25
      %s78 = ssub.s32 %s17, %s29
      %s79 = sor.u32 %s77, %s78
      %p80 = scmp.eq.s32.totalorder %s79, 0
      %s82 = sadd.s32 %s81, 1
      %s83 = scalar_select %p80, %s81, %s82
      %p86 = pneg %p80
      %p87 = scmp.eq.s32.totalorder %s10, 1
      %p88 = por %p86, %p87
      %p89 = scmp.ne.s32.totalorder %s81, %s84
      %p90 = scmp.eq.s32.totalorder %s10, 0
      %p91 = por %p89, %p90
      %p92 = scmp.ne.s32.totalorder %s81, %s84
      %p93 = scmp.eq.s32.totalorder %s15, 1
      %p94 = por %p92, %p93
      %p95 = scmp.ne.s32.totalorder %s84, %s85
      %p96 = scmp.eq.s32.totalorder %s15, 0
      %p97 = por %p95, %p96
      %p98 = scmp.ne.s32.totalorder %s84, %s85
      %p99 = scmp.eq.s32.totalorder %s16, 1
      %p100 = por %p98, %p99
      %p102 = scmp.ne.s32.totalorder %s85, %s101
      %p103 = scmp.eq.s32.totalorder %s16, 0
      %p104 = por %p102, %p103
      %s105 = ssub.s32 %s18, %s25
      %s106 = ssub.s32 %s17, %s29
      %s107 = sor.u32 %s105, %s106
      %p108 = scmp.eq.s32.totalorder %s107, 0
      %s110 = sadd.s32 %s109, 1
      %s111 = scalar_select %p108, %s109, %s110
      %p114 = pneg %p108
      %p115 = scmp.eq.s32.totalorder %s10, 1
      %p116 = por %p114, %p115
      %p117 = scmp.ne.s32.totalorder %s109, %s112
      %p118 = scmp.eq.s32.totalorder %s10, 0
      %p119 = por %p117, %p118
      %p120 = scmp.ne.s32.totalorder %s109, %s112
      %p121 = scmp.eq.s32.totalorder %s15, 1
      %p122 = por %p120, %p121
      %p123 = scmp.ne.s32.totalorder %s112, %s113
      %p124 = scmp.eq.s32.totalorder %s15, 0
      %p125 = por %p123, %p124
      %p126 = scmp.ne.s32.totalorder %s112, %s113
      %p127 = scmp.eq.s32.totalorder %s16, 1
      %p128 = por %p126, %p127
      %p130 = scmp.ne.s32.totalorder %s113, %s129
      %p131 = scmp.eq.s32.totalorder %s16, 0
      %p132 = por %p130, %p131
      %p133 = scmp.le.s32.totalorder 1, %s10
      %p134 = scmp.lt.s32.totalorder %s10, 3
      %p135 = pnand %p133, %p134
      %p136 = pneg %p135
      // Predicated region
      $region9: #{backproject_depth.1} parent=5 // pred_check
        _
      $region10: #{backproject_depth.1} parent=5 // pred_check_branch
        %138 = sbr.rel (%p135) target = $region12
      $region11: #{backproject_depth.1} parent=5 // pred_region
        %s139 = ssub.s32 %s10, 1
        // Predicated region
        $region13: #{backproject_depth.1} parent=11 // pred_check
          %p140 = pneg %p43
        $region14: #{backproject_depth.1} parent=11 // pred_check_branch
          %142 = sbr.rel (%p140) target = $region16
        $region15: #{backproject_depth.1} parent=11 // pred_region
          %s144 = ssub.s32 32, 32
          %145 = vsyncadd [#allocation3], %s144
          %s147 = sshll.u32 %s0, 4
          %s148 = int_to_ptr.vmem [resolvable:$true] %s147
          %150 = dma.vmem_to_smem %s148, 32, [#allocation2], [#allocation3]
        $region16: #{backproject_depth.1} parent=11 // pred_fallthru
          _
        // Predicated region
        $region17: #{backproject_depth.1} parent=11 // pred_check
          %p151 = pneg %p69
        $region18: #{backproject_depth.1} parent=11 // pred_check_branch
          %153 = sbr.rel (%p151) target = $region20
        $region19: #{backproject_depth.1} parent=11 // pred_region
          %p154 = scmp.lt.s32.totalorder %s19, 0
          %s155 = scalar_select %p154, %s19, 0
          %s156 = smul.addr %s155, 2
          %s157 = scalar_lea.vmem %s1, %s156
        $region20: #{backproject_depth.1} parent=11 // pred_fallthru
          _
      $region12: #{backproject_depth.1} parent=5 // pred_fallthru
        _
      %p158 = scmp.lt.s32.totalorder %s10, 2
      // Predicated region
      $region21: #{backproject_depth.1} parent=5 // pred_check
        %p159 = pneg %p158
      $region22: #{backproject_depth.1} parent=5 // pred_check_branch
        %161 = sbr.rel (%p159) target = $region24
      $region23: #{backproject_depth.1} parent=5 // pred_region
        // Predicated region
        $region25: #{backproject_depth.1} parent=23 // pred_check
          %p162 = pneg %p91
        $region26: #{backproject_depth.1} parent=23 // pred_check_branch
          %164 = sbr.rel (%p162) target = $region28
        $region27: #{backproject_depth.1} parent=23 // pred_region
          %p165 = scmp.lt.s32.totalorder %s18, 1
          %s166 = scalar_select %p165, %s18, 1
          %p167 = scmp.lt.s32.totalorder %s17, 0
          %s168 = scalar_select %p167, %s17, 0
          %s169 = sadd.s32 %s168, %s166
          %s170 = smul.addr %s169, 2
          %s171 = scalar_lea.vmem %s2, %s170
        $region28: #{backproject_depth.1} parent=23 // pred_fallthru
          _
      $region24: #{backproject_depth.1} parent=5 // pred_fallthru
        _
      %p172 = scmp.le.s32.totalorder 1, %s10
      %p173 = scmp.lt.s32.totalorder %s10, 3
      %p174 = pnand %p172, %p173
      %p175 = pneg %p174
      // Predicated region
      $region29: #{backproject_depth.1} parent=5 // pred_check
        _
      $region30: #{backproject_depth.1} parent=5 // pred_check_branch
        %177 = sbr.rel (%p174) target = $region32
      $region31: #{backproject_depth.1} parent=5 // pred_region
        %s178 = ssub.s32 %s10, 1
        // Predicated region
        $region33: #{backproject_depth.1} parent=31 // pred_check
          %p179 = pneg %p43
        $region34: #{backproject_depth.1} parent=31 // pred_check_branch
          %181 = sbr.rel (%p179) target = $region36
        $region35: #{backproject_depth.1} parent=31 // pred_region
          %182 = dma.done [#allocation3], 32
        $region36: #{backproject_depth.1} parent=31 // pred_fallthru
          _
        %183 = sfence
        %p184 = pneg %p43
        %p185 = pneg %p40
        %p186 = scmp.lt.s32.totalorder %s19, 0
        %s187 = scalar_select %p186, %s19, 0
        %s188 = smul.addr %s187, 2
        %s189 = scalar_lea.vmem %s1, %s188
        %p190 = pneg %p69
        %p191 = pneg %p66
        %p192 = scmp.lt.s32.totalorder %s20, 1
        %s193 = scalar_select %p192, %s20, 1
        %p194 = scmp.lt.s32.totalorder %s19, 0
        %s195 = scalar_select %p194, %s19, 0
        %s196 = sadd.s32 %s195, %s193
        %s197 = smul.addr %s196, 2
        %s198 = scalar_lea.vmem %s2, %s197
        %p199 = pneg %p97
        %p200 = pneg %p94
        %p201 = pneg %p125
        %p202 = pneg %p122
        %p203 = scmp.lt.s32.totalorder %s20, 1
        %s204 = scalar_select %p203, %s20, 1
        %p205 = scmp.lt.s32.totalorder %s19, 0
        %s206 = scalar_select %p205, %s19, 0
        %s207 = smul.addr %s204, 4
        %s208 = sadd.s32 %s206, %s207
        %s209 = smul.addr %s208, 2
        %s210 = scalar_lea.vmem %s3, %s209
        %p211 = scmp.lt.s32.totalorder %s19, 0
        %s212 = scalar_select %p211, %s19, 0
        %s213 = smul.addr %s212, 2
        %s214 = scalar_lea.vmem %s1, %s213
        %p215 = scmp.lt.s32.totalorder %s20, 1
        %s216 = scalar_select %p215, %s20, 1
        %p217 = scmp.lt.s32.totalorder %s19, 0
        %s218 = scalar_select %p217, %s19, 0
        %s219 = sadd.s32 %s218, %s216
        %s220 = smul.addr %s219, 2
        %s221 = scalar_lea.vmem %s2, %s220
        %p222 = scmp.lt.s32.totalorder %s20, 1
        %s223 = scalar_select %p222, %s20, 1
        %p224 = scmp.lt.s32.totalorder %s19, 0
        %s225 = scalar_select %p224, %s19, 0
        %s226 = smul.addr %s223, 4
        %s227 = sadd.s32 %s225, %s226
        %s228 = smul.addr %s227, 2
        %s229 = scalar_lea.vmem %s3, %s228
        %v230 = vld [vmem:[%s214] sm:$0x3]
        %s231 = scalar_lea.vmem %s214, 2
        %v232 = vld [vmem:[%s231] sm:$0x3]
        %v233 = vld [vmem:[%s221] sm:$0x3]
        %s234 = smul.u32 %s20, 128
        %s235 = sld [smem:[#allocation2 + %s234]]
        %s236 = sadd.s32 %s234, 1
        %s237 = sld [smem:[#allocation2 + %s236]]
        %s238 = sadd.s32 %s234, 2
        %s239 = sld [smem:[#allocation2 + %s238]]
        %s240 = sadd.s32 %s234, 4
        %s241 = sld [smem:[#allocation2 + %s240]]
        %s242 = sadd.s32 %s234, 5
        %s243 = sld [smem:[#allocation2 + %s242]]
        %s244 = sadd.s32 %s234, 6
        %s245 = sld [smem:[#allocation2 + %s244]]
        %s246 = sadd.s32 %s234, 8
        %s247 = sld [smem:[#allocation2 + %s246]]
        %s248 = sadd.s32 %s234, 9
        %s249 = sld [smem:[#allocation2 + %s248]]
        %s250 = sadd.s32 %s234, 10
        %s251 = sld [smem:[#allocation2 + %s250]]
        %v252 = vstv %s235
        %v253 = vmul.f32 %v252, %v230
        %v254 = vstv %s237
        %v255 = vmul.f32 %v254, %v232
        %v256 = vadd.f32 %v253, %v255
        %v257 = vstv %s239
        %v258 = vadd.f32 %v256, %v257
        %v259 = vmul.f32 %v233, %v258
        %260 = vst [vmem:[%s229] sm:$0x3] %v259
        %v261 = vstv %s241
        %v262 = vmul.f32 %v261, %v230
        %v263 = vstv %s243
        %v264 = vmul.f32 %v263, %v232
        %v265 = vadd.f32 %v262, %v264
        %v266 = vstv %s245
        %v267 = vadd.f32 %v265, %v266
        %v268 = vmul.f32 %v233, %v267
        %s269 = scalar_lea.vmem %s229, 2
        %270 = vst [vmem:[%s269] sm:$0x3] %v268
        %v271 = vstv %s247
        %v272 = vmul.f32 %v271, %v230
        %v273 = vstv %s249
        %v274 = vmul.f32 %v273, %v232
        %v275 = vadd.f32 %v272, %v274
        %v276 = vstv %s251
        %v277 = vadd.f32 %v275, %v276
        %v278 = vmul.f32 %v233, %v277
        %s279 = scalar_lea.vmem %s229, 4
        %280 = vst [vmem:[%s279] sm:$0x3] %v278
        %s281 = scalar_lea.vmem %s229, 6
        %282 = vst [vmem:[%s281] sm:$0x3] 1.0
        %p283 = scmp.lt.s32.totalorder %s20, 1
        %s284 = scalar_select %p283, %s20, 1
        %p285 = scmp.lt.s32.totalorder %s19, 0
        %s286 = scalar_select %p285, %s19, 0
        %s287 = smul.addr %s284, 4
        %s288 = sadd.s32 %s286, %s287
        %s289 = smul.addr %s288, 2
        %s290 = scalar_lea.vmem %s3, %s289
        // Predicated region
        $region37: #{backproject_depth.1} parent=31 // pred_check
          %p291 = pneg %p122
        $region38: #{backproject_depth.1} parent=31 // pred_check_branch
          %293 = sbr.rel (%p291) target = $region40
        $region39: #{backproject_depth.1} parent=31 // pred_region
          _
        $region40: #{backproject_depth.1} parent=31 // pred_fallthru
          _
      $region32: #{backproject_depth.1} parent=5 // pred_fallthru
        _
      %p294 = scmp.le.s32.totalorder 2, %s10
      // Predicated region
      $region41: #{backproject_depth.1} parent=5 // pred_check
        %p295 = pneg %p294
      $region42: #{backproject_depth.1} parent=5 // pred_check_branch
        %297 = sbr.rel (%p295) target = $region44
      $region43: #{backproject_depth.1} parent=5 // pred_region
        %s298 = ssub.s32 %s10, 2
        // Predicated region
        $region45: #{backproject_depth.1} parent=43 // pred_check
          %p299 = pneg %p128
        $region46: #{backproject_depth.1} parent=43 // pred_check_branch
          %301 = sbr.rel (%p299) target = $region48
        $region47: #{backproject_depth.1} parent=43 // pred_region
          %p302 = scmp.lt.s32.totalorder %s22, 1
          %s303 = scalar_select %p302, %s22, 1
          %p304 = scmp.lt.s32.totalorder %s21, 0
          %s305 = scalar_select %p304, %s21, 0
          %s306 = smul.addr %s303, 4
          %s307 = sadd.s32 %s305, %s306
          %s308 = smul.addr %s307, 2
          %s309 = scalar_lea.vmem %s3, %s308
        $region48: #{backproject_depth.1} parent=43 // pred_fallthru
          _
      $region44: #{backproject_depth.1} parent=5 // pred_fallthru
        _
    $region6: #{backproject_depth.1} parent=1 // loop_footer
      %s14 = sadd.s32 1, %s10
    $region7: #{backproject_depth.1} parent=1 // loop_footer_branch
      %9 = sbr.rel target = $region3
    $region8: #{backproject_depth.1} parent=1 // loop_exit
      _
    %310 = vsyncpa [#allocation3], 1
    %s311 = scalar_lea.sflag [#allocation3], 1
    %312 = vsyncpa %s311, 1

</llo_original>
